<compile_context>
chip_gen: v7x
topology: tpu7x:2x2x1
jax: 0.10.0
libtpu: 0.0.40
codegen_flags: <defaults>
</compile_context>

<pallas_src>
import jax
import jax.numpy as jnp
from jax.experimental import pallas as pl
from jax.experimental.pallas import tpu as pltpu


def _round_up(x, m):
    return (x + m - 1) // m * m


def _linear_gelu_kernel(x_ref, w_ref, b_ref, o_ref):
    # x: (TM, F_in), w: (F_in, F_out_pad)  (already transposed in the wrapper),
    # b: (1, F_out_pad)
    x = x_ref[...]
    w = w_ref[...]
    b = b_ref[...]

    # Contract directly over F_in — no in-kernel transpose; f32 accumulation on the MXU.
    v3 = jnp.dot(x, w, preferred_element_type=jnp.float32) + b

    # Exact-erf GELU epilogue: 0.5 * v3 * (erf(v3 / sqrt(2)) + 1)
    u = v3 * 0.7071067811865476
    o_ref[...] = (0.5 * v3 * (jax.lax.erf(u) + 1.0)).astype(o_ref.dtype)


def linear_gelu(x, weight, bias, *, tm=512):
    """x: (..., F_in) f32, weight: (F_out, F_in) (PyTorch layout), bias: (F_out,)."""
    orig_shape = x.shape
    f_in = orig_shape[-1]
    f_out = weight.shape[0]

    x2d = x.reshape(-1, f_in).astype(jnp.float32)
    n = x2d.shape[0]

    # Lane-dense output: pad F_out up to a multiple of 128.
    f_out_pad = _round_up(max(f_out, 1), 128)

    # Row tile: multiple of 8 (sublane), capped at `tm` (~512 ≈ HBM-roofline sweet spot
    # for f32); pad N so the grid divides evenly (padded rows are sliced off below).
    tm = min(tm, _round_up(n, 8))
    n_pad = _round_up(n, tm)
    if n_pad != n:
        x2d = jnp.pad(x2d, ((0, n_pad - n), (0, 0)))

    # Pre-transpose the static weight once: (F_in, F_out_pad); zero-pad extra lanes.
    w_t = jnp.zeros((f_in, f_out_pad), jnp.float32).at[:, :f_out].set(
        weight.astype(jnp.float32).T
    )
    b_p = jnp.zeros((1, f_out_pad), jnp.float32).at[:, :f_out].set(
        bias.astype(jnp.float32).reshape(1, f_out)
    )

    grid = (n_pad // tm,)

    cost = pl.CostEstimate(
        flops=2 * n_pad * f_in * f_out_pad,
        transcendentals=n_pad * f_out_pad,
        bytes_accessed=4 * (n_pad * f_in + f_in * f_out_pad + 1 * f_out_pad
                            + n_pad * f_out_pad),
    )

    out = pl.pallas_call(
        _linear_gelu_kernel,
        out_shape=jax.ShapeDtypeStruct((n_pad, f_out_pad), jnp.float32),
        grid=grid,
        in_specs=[
            pl.BlockSpec((tm, f_in), lambda i: (i, 0)),
            # Weight / bias: constant index_map → stay resident, no re-DMA per step.
            pl.BlockSpec((f_in, f_out_pad), lambda i: (0, 0)),
            pl.BlockSpec((1, f_out_pad), lambda i: (0, 0)),
        ],
        out_specs=pl.BlockSpec((tm, f_out_pad), lambda i: (i, 0)),
        compiler_params=pltpu.CompilerParams(
            dimension_semantics=("parallel",),
        ),
        cost_estimate=cost,
    )(x2d, w_t, b_p)

    out = out[:n, :f_out]
    return out.reshape(*orig_shape[:-1], f_out)


if __name__ == "__main__":
    key = jax.random.PRNGKey(0)
    k_x, k_w, k_b = jax.random.split(key, 3)

    # Module: nn.Linear(5, 5). Input must have last dim = 5.
    # Small shape consistent with the module: (2, 3, 3, 5).
    x = jax.random.normal(k_x, (2, 3, 3, 5), dtype=jnp.float32)

    # Deterministic parameter init (PyTorch-style uniform(-1/sqrt(fan_in), 1/sqrt(fan_in))).
    bound = 1.0 / jnp.sqrt(5.0)
    weight = jax.random.uniform(k_w, (5, 5), minval=-bound, maxval=bound, dtype=jnp.float32)
    bias = jax.random.uniform(k_b, (5,), minval=-bound, maxval=bound, dtype=jnp.float32)

    out = linear_gelu(x, weight, bias)
    jax.block_until_ready(out)

    # Reference check in plain JAX (exact-erf GELU, matching the PyTorch forward).
    v3 = jnp.einsum("...i,oi->...o", x, weight) + bias
    ref = (v3 * 0.5) * (jax.lax.erf(v3 * 0.7071067811865476) + 1.0)
    assert out.shape == ref.shape
    assert jnp.allclose(out, ref, atol=1e-5, rtol=1e-5)

    print("KERNEL_OK")
</pallas_src>

<mosaic_0001>
module attributes {stable_mosaic.version = 11 : i64} {
  func.func @_linear_gelu_kernel(%arg0: i32, %arg1: memref<24x5xf32, #tpu.memory_space<vmem>>, %arg2: memref<5x128xf32, #tpu.memory_space<vmem>>, %arg3: memref<1x128xf32, #tpu.memory_space<vmem>>, %arg4: memref<24x128xf32, #tpu.memory_space<vmem>>) attributes {dimension_semantics = [#tpu.dimension_semantics<parallel>], iteration_bounds = array<i64: 1>, scalar_prefetch = 0 : i64, scratch_operands = 0 : i64, tpu.core_type = #tpu.core_type<tc>, window_params = [{transform_indices = @transform_0, window_bounds = array<i64: 24, 5>}, {pipeline_mode = #tpu.pipeline_mode<synchronous>, transform_indices = @transform_1, window_bounds = array<i64: 5, 128>}, {pipeline_mode = #tpu.pipeline_mode<synchronous>, transform_indices = @transform_2, window_bounds = array<i64: 1, 128>}, {transform_indices = @transform_3, window_bounds = array<i64: 24, 128>}]} {
    %c0 = arith.constant 0 : index
    %c0_0 = arith.constant 0 : index
    %0 = vector.load %arg1[%c0, %c0_0] : memref<24x5xf32, #tpu.memory_space<vmem>>, vector<24x5xf32>
    %c0_1 = arith.constant 0 : index
    %c0_2 = arith.constant 0 : index
    %1 = vector.load %arg2[%c0_1, %c0_2] : memref<5x128xf32, #tpu.memory_space<vmem>>, vector<5x128xf32>
    %c0_3 = arith.constant 0 : index
    %c0_4 = arith.constant 0 : index
    %2 = vector.load %arg3[%c0_3, %c0_4] : memref<1x128xf32, #tpu.memory_space<vmem>>, vector<1x128xf32>
    %cst = arith.constant dense<0.000000e+00> : vector<24x128xf32>
    %3 = tpu.matmul %0, %1, %cst {dimension_numbers = #tpu.dot_dimension_numbers<[1], [0], [0], [1], [0, 0, 1, 1], [], []>} : vector<24x5xf32>, vector<5x128xf32>, vector<24x128xf32> -> vector<24x128xf32>
    %4 = vector.broadcast %2 : vector<1x128xf32> to vector<24x128xf32>
    %5 = arith.addf %3, %4 : vector<24x128xf32>
    %cst_5 = arith.constant 0.707106769 : f32
    %6 = vector.broadcast %cst_5 : f32 to vector<24x128xf32>
    %7 = arith.mulf %5, %6 : vector<24x128xf32>
    %cst_6 = arith.constant 5.000000e-01 : f32
    %8 = vector.broadcast %cst_6 : f32 to vector<24x128xf32>
    %9 = arith.mulf %8, %5 : vector<24x128xf32>
    %10 = math.erf %7 : vector<24x128xf32>
    %cst_7 = arith.constant 1.000000e+00 : f32
    %11 = vector.broadcast %cst_7 : f32 to vector<24x128xf32>
    %12 = arith.addf %10, %11 : vector<24x128xf32>
    %13 = arith.mulf %9, %12 : vector<24x128xf32>
    %c0_8 = arith.constant 0 : index
    %c0_9 = arith.constant 0 : index
    %14 = vector.load %arg4[%c0_8, %c0_9] : memref<24x128xf32, #tpu.memory_space<vmem>>, vector<24x128xf32>
    tpu.vector_store %arg4[%c0_8, %c0_9], %13 {strides = array<i32>} : memref<24x128xf32, #tpu.memory_space<vmem>>, vector<24x128xf32>,
    return
  }
  func.func @transform_0(%arg0: i32) -> (i32, i32) {
    %c0_i32 = arith.constant 0 : i32
    %c0_i32_0 = arith.constant 0 : i32
    return %arg0, %c0_i32 : i32, i32
  }
  func.func @transform_1(%arg0: i32) -> (i32, i32) {
    %c0_i32 = arith.constant 0 : i32
    %c0_i32_0 = arith.constant 0 : i32
    %c0_i32_1 = arith.constant 0 : i32
    return %c0_i32, %c0_i32_0 : i32, i32
  }
  func.func @transform_2(%arg0: i32) -> (i32, i32) {
    %c0_i32 = arith.constant 0 : i32
    %c0_i32_0 = arith.constant 0 : i32
    %c0_i32_1 = arith.constant 0 : i32
    return %c0_i32, %c0_i32_0 : i32, i32
  }
  func.func @transform_3(%arg0: i32) -> (i32, i32) {
    %c0_i32 = arith.constant 0 : i32
    %c0_i32_0 = arith.constant 0 : i32
    return %arg0, %c0_i32 : i32, i32
  }
}

</mosaic_0001>

<llo_original>
// kernel: tpu_custom_call.1
$region0: #{tpu_custom_call.1}
  #allocation0 [shape = 'u32[]', space=smem, size = 0x4, offset = 0x4, fixed_abs, tag = 'smem constant byte address 0x4 - core index']
  #allocation1 [shape = 'u32[144,128]{1,0:T(1,128)}', space=vmem, size = 0x12000, scoped, tag = 'internal scratch']
  %s0 = inlined_call_operand.vmem [shape: f32[24,5], index: 0, kind: input, shape index: {}]
  %s1 = inlined_call_operand.vmem [shape: f32[5,128], index: 1, kind: input, shape index: {}]
  %s2 = inlined_call_operand.vmem [shape: f32[1,128], index: 2, kind: input, shape index: {}]
  %s3 = inlined_call_operand.hbm [shape: f32[24,128], index: 3, kind: output, shape index: {}]
  %s4 = sld [smem:[#allocation0]]
  $region22: #{tpu_custom_call.1} parent=0
    _
  %s6 = ssub.s32 1, %s4
  %s7 = scalar_select 0, %s6, %s4
  $region1: #{tpu_custom_call.1} parent=0
    #allocation2 [shape = 'u8[12288]{0}', space=vmem, size = 0x3000, scoped, tag = 'output window, operand 0, single buffered']
    #allocation3 [shape = 's32[1]{0}', space=sflag, size = 0x4, scoped, tag = 'scoped memory for tpu_custom_call.1']
    %8 = vsyncpa [#allocation3], 0
    // Predicated region
    $region2: #{tpu_custom_call.1} parent=1 // pred_check
      _
    $region3: #{tpu_custom_call.1} parent=1 // pred_check_branch
      %10 = sbr.rel (0) target = $region5
    $region4: #{tpu_custom_call.1} parent=1 // pred_region
      _
    $region5: #{tpu_custom_call.1} parent=1 // pred_fallthru
      _
    // Predicated region
    $region6: #{tpu_custom_call.1} parent=1 // pred_check
      _
    $region7: #{tpu_custom_call.1} parent=1 // pred_check_branch
      %12 = sbr.rel (0) target = $region9
    $region8: #{tpu_custom_call.1} parent=1 // pred_region
      _
    $region9: #{tpu_custom_call.1} parent=1 // pred_fallthru
      _
    // Predicated region
    $region10: #{tpu_custom_call.1} parent=1 // pred_check
      _
    $region11: #{tpu_custom_call.1} parent=1 // pred_check_branch
      %14 = sbr.rel (0) target = $region13
    $region12: #{tpu_custom_call.1} parent=1 // pred_region
      _
    $region13: #{tpu_custom_call.1} parent=1 // pred_fallthru
      _
    %v15 = vld [vmem:[%s0] sm:$0xff]
    %v16 = vld [vmem:[%s0 + $0x8] sm:$0xff]
    %v17 = vld [vmem:[%s0 + $0x10] sm:$0xff]
    %v18 = vld [vmem:[%s1] sm:$0x1f]
    %v19 = vld [vmem:[%s2] sm:$0x1]
    %v21 = vlaneseq
    %v22 = vshrl.u32 %v21, 7
    %v23 = vsub.s32 0, %v22
    %v24 = vrot.slane %v19, %v23
    %vm26 = vcmask 39936
    %v28 = vsel %vm26, %v15, 0
    %v31 = vsel %vm26, %v16, 0
    %v34 = vsel %vm26, %v17, 0
    %vm36 = vcmask 1044480
    %v38 = vsel %vm36, %v18, 0
    %40 = vmatprep.subr.mxu0 0.0
    %41 = vmatpush1.msra.mxu0 %v38
    %42 = vmatprep.subr.mxu0 0.0
    %43 = vmatpush1.msra.mxu0 0.0
    %44 = vmatprep.subr.mxu0 0.0
    %45 = vmatpush1.msra.mxu0 0.0
    %46 = vmatprep.subr.mxu0 0.0
    %47 = vmatpush1.msra.mxu0 0.0
    %48 = vmatprep.subr.mxu0 0.0
    %49 = vmatpush1.msra.mxu0 0.0
    %50 = vmatprep.subr.mxu0 0.0
    %51 = vmatpush1.msra.mxu0 0.0
    %52 = vmatprep.subr.mxu0 0.0
    %53 = vmatpush1.msra.mxu0 0.0
    %54 = vmatprep.subr.mxu0 0.0
    %55 = vmatpush1.msra.mxu0 0.0
    %56 = vmatprep.subr.mxu0 0.0
    %57 = vmatpush1.msra.mxu0 0.0
    %58 = vmatprep.subr.mxu0 0.0
    %59 = vmatpush1.msra.mxu0 0.0
    %60 = vmatprep.subr.mxu0 0.0
    %61 = vmatpush1.msra.mxu0 0.0
    %62 = vmatprep.subr.mxu0 0.0
    %63 = vmatpush1.msra.mxu0 0.0
    %64 = vmatprep.subr.mxu0 0.0
    %65 = vmatpush1.msra.mxu0 0.0
    %66 = vmatprep.subr.mxu0 0.0
    %67 = vmatpush1.msra.mxu0 0.0
    %68 = vmatprep.subr.mxu0 0.0
    %69 = vmatpush1.msra.mxu0 0.0
    %70 = vmatprep.subr.mxu0 0.0
    %71 = vmatpush1.msra.mxu0 0.0
    %72 = vmatprep.subr.mxu0 0.0
    %73 = vmatpush1.msra.mxu0 0.0
    %74 = vmatprep.subr.mxu0 0.0
    %75 = vmatpush1.msra.mxu0 0.0
    %76 = vmatprep.subr.mxu0 0.0
    %77 = vmatpush1.msra.mxu0 0.0
    %78 = vmatprep.subr.mxu0 0.0
    %79 = vmatpush1.msra.mxu0 0.0
    %80 = vmatprep.subr.mxu0 0.0
    %81 = vmatpush1.msra.mxu0 0.0
    %82 = vmatprep.subr.mxu0 0.0
    %83 = vmatpush1.msra.mxu0 0.0
    %84 = vmatprep.subr.mxu0 0.0
    %85 = vmatpush1.msra.mxu0 0.0
    %86 = vmatprep.subr.mxu0 0.0
    %87 = vmatpush1.msra.mxu0 0.0
    %88 = vmatprep.subr.mxu0 0.0
    %89 = vmatpush1.msra.mxu0 0.0
    %90 = vmatprep.subr.mxu0 0.0
    %91 = vmatpush1.msra.mxu0 0.0
    %92 = vmatprep.subr.mxu0 0.0
    %93 = vmatpush1.msra.mxu0 0.0
    %94 = vmatprep.subr.mxu0 0.0
    %95 = vmatpush1.msra.mxu0 0.0
    %96 = vmatprep.subr.mxu0 0.0
    %97 = vmatpush1.msra.mxu0 0.0
    %98 = vmatprep.subr.mxu0 0.0
    %99 = vmatpush1.msra.mxu0 0.0
    %100 = vmatprep.subr.mxu0 0.0
    %101 = vmatpush1.msra.mxu0 0.0
    %102 = vmatprep.subr.mxu0 0.0
    %103 = vmatpush1.msra.mxu0 0.0
    %104 = vmatprep.mubr.f32.mxu0 0.0
    %105 = vmatmul.mubr.f32.gmra.mrb[0].mxu0 %v28
    %v106 = vpop.f32.mrb[0].mxu0
    %v107 = vadd.f32 %v24, %v106
    %v108 = vpop.f32.mrb[0].mxu0
    %109 = vmatprep.mubr.f32.mxu0 0.0
    %110 = vmatmul.mubr.f32.gmra.mrb[0].mxu0 %v31
    %v111 = vpop.f32.mrb[0].mxu0
    %v112 = vadd.f32 %v24, %v111
    %v113 = vpop.f32.mrb[0].mxu0
    %114 = vmatprep.mubr.f32.mxu0 0.0
    %115 = vmatmul.mubr.f32.gmra.mrb[0].mxu0 %v34
    %v116 = vpop.f32.mrb[0].mxu0
    %v117 = vadd.f32 %v24, %v116
    %v118 = vpop.f32.mrb[0].mxu0
    %119 = vdwg.mxu0
    %v120 = vmul.f32 %v107, 0.70710677
    %v121 = vmul.f32 %v112, 0.70710677
    %v122 = vmul.f32 %v117, 0.70710677
    %v123 = vmul.f32 %v107, 0.5
    %v124 = vmul.f32 %v112, 0.5
    %v125 = vmul.f32 %v117, 0.5
    %v126 = verf.f32.pop %v120
    %v127 = verf.f32.pop %v121
    %v128 = verf.f32.pop %v122
    %v129 = vadd.f32 %v126, 1.0
    %v130 = vadd.f32 %v127, 1.0
    %v131 = vadd.f32 %v128, 1.0
    %v132 = vmul.f32 %v123, %v129
    %v133 = vmul.f32 %v124, %v130
    %v134 = vmul.f32 %v125, %v131
    %135 = vst [vmem:[#allocation2] sm:$0xff] %v132
    %136 = vst [vmem:[#allocation2 + $0x8] sm:$0xff] %v133
    %137 = vst [vmem:[#allocation2 + $0x10] sm:$0xff] %v134
    // Predicated region
    $region14: #{tpu_custom_call.1} parent=1 // pred_check
      _
    $region15: #{tpu_custom_call.1} parent=1 // pred_check_branch
      %139 = sbr.rel (0) target = $region17
    $region16: #{tpu_custom_call.1} parent=1 // pred_region
      %s141 = ssub.s32 384, 384
      %142 = vsyncadd [#allocation3], %s141
      %s143 = sshll.u32 [#allocation2], 4
      %s144 = int_to_ptr.vmem [resolvable:$true] %s143
      %149 = dma.vmem_to_hbm [thread:$0]  %s144, 384, %s3, [#allocation3], 128, 128, 8
    $region17: #{tpu_custom_call.1} parent=1 // pred_fallthru
      _
    // Predicated region
    $region18: #{tpu_custom_call.1} parent=1 // pred_check
      _
    $region19: #{tpu_custom_call.1} parent=1 // pred_check_branch
      %151 = sbr.rel (0) target = $region21
    $region20: #{tpu_custom_call.1} parent=1 // pred_region
      %152 = dma.done [#allocation3], 384
    $region21: #{tpu_custom_call.1} parent=1 // pred_fallthru
      _
    %153 = vsyncpa [#allocation3], 1

</llo_original>
